<compile_context>
chip_gen: v7x
topology: tpu7x:2x2x1
jax: 0.10.0
libtpu: 0.0.40
codegen_flags: <defaults>
</compile_context>

<pallas_src>
import functools

import jax
import jax.numpy as jnp
from jax.experimental import pallas as pl
from jax.experimental.pallas import tpu as pltpu


def _round_up(x, m):
    return ((x + m - 1) // m) * m


def _box_to_affine_kernel(x_ref, o_ref, *, H, W, inv_H, inv_W, inv_Hm1, inv_Wm1):
    # x_ref: (4, TILE_B) -- sublane rows: xc, yc, w, h; lane axis = batch.
    # o_ref: (6, TILE_B) -- sublane rows: th22, 0, th23, 0, th11, th13.
    x = x_ref[...].astype(jnp.float32)
    xc = x[0:1, :]
    yc = x[1:2, :]
    w = x[2:3, :]
    h = x[3:4, :]

    # Divisions hoisted to Python-time reciprocals (VPU multiplies only).
    th13 = (yc * 2.0 - (1.0 + H)) * inv_Hm1
    th23 = (xc * 2.0 - (1.0 + W)) * inv_Wm1
    th22 = w * inv_W
    th11 = h * inv_H
    zeros = jnp.zeros_like(xc)

    dt = o_ref.dtype
    # Direct sublane-row stores (no lane shuffles / concatenate).
    o_ref[0:1, :] = th22.astype(dt)
    o_ref[1:2, :] = zeros.astype(dt)
    o_ref[2:3, :] = th23.astype(dt)
    o_ref[3:4, :] = zeros.astype(dt)
    o_ref[4:5, :] = th11.astype(dt)
    o_ref[5:6, :] = th13.astype(dt)


def box_to_affine(boxes, H, W, *, tile_b=1024):
    """boxes: (B, 4) array of (xc, yc, w, h). Returns (B, 2, 3) affine params."""
    assert boxes.ndim == 2 and boxes.shape[1] == 4, "Expected input of shape B x 4"
    assert H and W, "Need H and W"
    assert H > 1 and W > 1, "H and W must be > 1 (division by H-1 / W-1)"
    B = boxes.shape[0]
    dtype = boxes.dtype

    # Lane-dense layout: batch on the lane axis. Pad B to a multiple of the
    # lane tile (128-aligned) so block shapes satisfy the (8, 128) rule.
    tile_b = min(int(tile_b), _round_up(B, 128))
    B_pad = _round_up(B, tile_b)
    xt = boxes.T  # (4, B)  -- pure layout glue
    if B_pad != B:
        xt = jnp.pad(xt, ((0, 0), (0, B_pad - B)))

    kernel = functools.partial(
        _box_to_affine_kernel,
        H=float(H),
        W=float(W),
        inv_H=1.0 / float(H),
        inv_W=1.0 / float(W),
        inv_Hm1=1.0 / (float(H) - 1.0),
        inv_Wm1=1.0 / (float(W) - 1.0),
    )

    grid = (B_pad // tile_b,)
    packed = pl.pallas_call(
        kernel,
        out_shape=jax.ShapeDtypeStruct((6, B_pad), dtype),
        grid=grid,
        in_specs=[pl.BlockSpec((4, tile_b), lambda i: (0, i))],
        out_specs=pl.BlockSpec((6, tile_b), lambda i: (0, i)),
        compiler_params=pltpu.CompilerParams(
            dimension_semantics=("parallel",),
        ),
    )(xt)

    # Glue: strip padding and match the PyTorch output layout (B, 2, 3).
    return packed[:, :B].T.reshape(B, 2, 3)


def _reference(boxes, H, W):
    xc, yc, w, h = boxes[:, 0], boxes[:, 1], boxes[:, 2], boxes[:, 3]
    th13 = (yc * 2 - 1 - H) / (H - 1)
    th23 = (xc * 2 - 1 - W) / (W - 1)
    th22 = w / W
    th11 = h / H
    z = jnp.zeros_like(xc)
    r1 = jnp.stack((th22, z, th23), axis=1)[:, None, :]
    r2 = jnp.stack((z, th11, th13), axis=1)[:, None, :]
    return jnp.concatenate((r1, r2), axis=1)


if __name__ == "__main__":
    key = jax.random.PRNGKey(0)
    B, H, W = 8, 16, 16
    k1, k2 = jax.random.split(key)
    # boxes: centers within the image, positive widths/heights
    centers = jax.random.uniform(k1, (B, 2), jnp.float32, 1.0, float(min(H, W)))
    sizes = jax.random.uniform(k2, (B, 2), jnp.float32, 1.0, float(min(H, W)) / 2)
    boxes = jnp.concatenate([centers, sizes], axis=1)  # (B, 4) = (xc, yc, w, h)

    out = box_to_affine(boxes, H, W)
    out = jax.block_until_ready(out)

    ref = _reference(boxes, H, W)
    assert out.shape == (B, 2, 3), out.shape
    assert jnp.allclose(out, ref, atol=1e-6, rtol=1e-6), (out, ref)

    # Also exercise a multi-tile grid (B spanning >1 lane tile).
    B2 = 300
    k3, k4 = jax.random.split(k2)
    c2 = jax.random.uniform(k3, (B2, 2), jnp.float32, 1.0, float(min(H, W)))
    s2 = jax.random.uniform(k4, (B2, 2), jnp.float32, 1.0, float(min(H, W)) / 2)
    boxes2 = jnp.concatenate([c2, s2], axis=1)
    out2 = jax.block_until_ready(box_to_affine(boxes2, H, W, tile_b=128))
    assert jnp.allclose(out2, _reference(boxes2, H, W), atol=1e-6, rtol=1e-6)

    print("KERNEL_OK")
</pallas_src>

<mosaic_0001>
module attributes {stable_mosaic.version = 11 : i64} {
  func.func @_box_to_affine_kernel(%arg0: i32, %arg1: memref<4x128xf32, #tpu.memory_space<vmem>>, %arg2: memref<6x128xf32, #tpu.memory_space<vmem>>) attributes {dimension_semantics = [#tpu.dimension_semantics<parallel>], iteration_bounds = array<i64: 1>, scalar_prefetch = 0 : i64, scratch_operands = 0 : i64, tpu.core_type = #tpu.core_type<tc>, window_params = [{transform_indices = @transform_0, window_bounds = array<i64: 4, 128>}, {transform_indices = @transform_1, window_bounds = array<i64: 6, 128>}]} {
    %c0 = arith.constant 0 : index
    %c0_0 = arith.constant 0 : index
    %0 = vector.load %arg1[%c0, %c0_0] : memref<4x128xf32, #tpu.memory_space<vmem>>, vector<4x128xf32>
    %1 = vector.extract_strided_slice %0 {offsets = [0, 0], sizes = [1, 128], strides = [1, 1]} : vector<4x128xf32> to vector<1x128xf32>
    %2 = vector.extract_strided_slice %0 {offsets = [1, 0], sizes = [1, 128], strides = [1, 1]} : vector<4x128xf32> to vector<1x128xf32>
    %3 = vector.extract_strided_slice %0 {offsets = [2, 0], sizes = [1, 128], strides = [1, 1]} : vector<4x128xf32> to vector<1x128xf32>
    %4 = vector.extract_strided_slice %0 {offsets = [3, 0], sizes = [1, 128], strides = [1, 1]} : vector<4x128xf32> to vector<1x128xf32>
    %cst = arith.constant 2.000000e+00 : f32
    %5 = vector.broadcast %cst : f32 to vector<1x128xf32>
    %6 = arith.mulf %2, %5 : vector<1x128xf32>
    %cst_1 = arith.constant 1.700000e+01 : f32
    %7 = vector.broadcast %cst_1 : f32 to vector<1x128xf32>
    %8 = arith.subf %6, %7 : vector<1x128xf32>
    %cst_2 = arith.constant 0.0666666701 : f32
    %9 = vector.broadcast %cst_2 : f32 to vector<1x128xf32>
    %10 = arith.mulf %8, %9 : vector<1x128xf32>
    %cst_3 = arith.constant 2.000000e+00 : f32
    %11 = vector.broadcast %cst_3 : f32 to vector<1x128xf32>
    %12 = arith.mulf %1, %11 : vector<1x128xf32>
    %cst_4 = arith.constant 1.700000e+01 : f32
    %13 = vector.broadcast %cst_4 : f32 to vector<1x128xf32>
    %14 = arith.subf %12, %13 : vector<1x128xf32>
    %cst_5 = arith.constant 0.0666666701 : f32
    %15 = vector.broadcast %cst_5 : f32 to vector<1x128xf32>
    %16 = arith.mulf %14, %15 : vector<1x128xf32>
    %cst_6 = arith.constant 6.250000e-02 : f32
    %17 = vector.broadcast %cst_6 : f32 to vector<1x128xf32>
    %18 = arith.mulf %3, %17 : vector<1x128xf32>
    %cst_7 = arith.constant 6.250000e-02 : f32
    %19 = vector.broadcast %cst_7 : f32 to vector<1x128xf32>
    %20 = arith.mulf %4, %19 : vector<1x128xf32>
    %cst_8 = arith.constant 0.000000e+00 : f32
    %21 = vector.broadcast %cst_8 : f32 to vector<1x128xf32>
    %c0_9 = arith.constant 0 : index
    %c0_10 = arith.constant 0 : index
    %22 = vector.load %arg2[%c0_9, %c0_10] : memref<6x128xf32, #tpu.memory_space<vmem>>, vector<1x128xf32>
    tpu.vector_store %arg2[%c0_9, %c0_10], %18 {strides = array<i32>} : memref<6x128xf32, #tpu.memory_space<vmem>>, vector<1x128xf32>,
    %c1 = arith.constant 1 : index
    %c0_11 = arith.constant 0 : index
    %23 = vector.load %arg2[%c1, %c0_11] : memref<6x128xf32, #tpu.memory_space<vmem>>, vector<1x128xf32>
    tpu.vector_store %arg2[%c1, %c0_11], %21 {strides = array<i32>} : memref<6x128xf32, #tpu.memory_space<vmem>>, vector<1x128xf32>,
    %c2 = arith.constant 2 : index
    %c0_12 = arith.constant 0 : index
    %24 = vector.load %arg2[%c2, %c0_12] : memref<6x128xf32, #tpu.memory_space<vmem>>, vector<1x128xf32>
    tpu.vector_store %arg2[%c2, %c0_12], %16 {strides = array<i32>} : memref<6x128xf32, #tpu.memory_space<vmem>>, vector<1x128xf32>,
    %c3 = arith.constant 3 : index
    %c0_13 = arith.constant 0 : index
    %25 = vector.load %arg2[%c3, %c0_13] : memref<6x128xf32, #tpu.memory_space<vmem>>, vector<1x128xf32>
    tpu.vector_store %arg2[%c3, %c0_13], %21 {strides = array<i32>} : memref<6x128xf32, #tpu.memory_space<vmem>>, vector<1x128xf32>,
    %c4 = arith.constant 4 : index
    %c0_14 = arith.constant 0 : index
    %26 = vector.load %arg2[%c4, %c0_14] : memref<6x128xf32, #tpu.memory_space<vmem>>, vector<1x128xf32>
    tpu.vector_store %arg2[%c4, %c0_14], %20 {strides = array<i32>} : memref<6x128xf32, #tpu.memory_space<vmem>>, vector<1x128xf32>,
    %c5 = arith.constant 5 : index
    %c0_15 = arith.constant 0 : index
    %27 = vector.load %arg2[%c5, %c0_15] : memref<6x128xf32, #tpu.memory_space<vmem>>, vector<1x128xf32>
    tpu.vector_store %arg2[%c5, %c0_15], %10 {strides = array<i32>} : memref<6x128xf32, #tpu.memory_space<vmem>>, vector<1x128xf32>,
    return
  }
  func.func @transform_0(%arg0: i32) -> (i32, i32) {
    %c0_i32 = arith.constant 0 : i32
    %c0_i32_0 = arith.constant 0 : i32
    return %c0_i32, %arg0 : i32, i32
  }
  func.func @transform_1(%arg0: i32) -> (i32, i32) {
    %c0_i32 = arith.constant 0 : i32
    %c0_i32_0 = arith.constant 0 : i32
    return %c0_i32, %arg0 : i32, i32
  }
}

</mosaic_0001>

<llo_original>
// kernel: tpu_custom_call.1
$region0: #{tpu_custom_call.1}
  #allocation0 [shape = 'u32[]', space=smem, size = 0x4, offset = 0x4, fixed_abs, tag = 'smem constant byte address 0x4 - core index']
  #allocation1 [shape = 'u32[144,128]{1,0:T(1,128)}', space=vmem, size = 0x12000, scoped, tag = 'internal scratch']
  %s0 = inlined_call_operand.hbm [shape: f32[4,128], index: 0, kind: input, shape index: {}]
  %s1 = inlined_call_operand.hbm [shape: f32[6,128], index: 1, kind: output, shape index: {}]
  %s2 = sld [smem:[#allocation0]]
  $region18: #{tpu_custom_call.1} parent=0
    _
  %s4 = ssub.s32 1, %s2
  %s5 = scalar_select 0, %s4, %s2
  $region1: #{tpu_custom_call.1} parent=0
    #allocation2 [shape = 'u8[2048]{0}', space=vmem, size = 0x800, scoped, tag = 'input window, operand 0, single buffered']
    #allocation3 [shape = 's32[1]{0}', space=sflag, size = 0x4, scoped, tag = 'scoped memory for tpu_custom_call.1']
    #allocation4 [shape = 's32[1]{0}', space=sflag, size = 0x4, scoped, tag = 'scoped memory for tpu_custom_call.1']
    #allocation5 [shape = 'u8[4096]{0}', space=vmem, size = 0x1000, scoped, tag = 'output window, operand 0, single buffered']
    %6 = vsyncpa [#allocation3], 0
    %7 = vsyncpa [#allocation4], 0
    // Predicated region
    $region2: #{tpu_custom_call.1} parent=1 // pred_check
      _
    $region3: #{tpu_custom_call.1} parent=1 // pred_check_branch
      %9 = sbr.rel (0) target = $region5
    $region4: #{tpu_custom_call.1} parent=1 // pred_region
      %s11 = ssub.s32 64, 64
      %12 = vsyncadd [#allocation3], %s11
      %s14 = sshll.u32 [#allocation2], 4
      %s15 = int_to_ptr.vmem [resolvable:$true] %s14
      %17 = dma.hbm_to_vmem [thread:$0]  %s0, 64, %s15, [#allocation3]
    $region5: #{tpu_custom_call.1} parent=1 // pred_fallthru
      _
    // Predicated region
    $region6: #{tpu_custom_call.1} parent=1 // pred_check
      _
    $region7: #{tpu_custom_call.1} parent=1 // pred_check_branch
      %19 = sbr.rel (0) target = $region9
    $region8: #{tpu_custom_call.1} parent=1 // pred_region
      %20 = dma.done [#allocation3], 64
    $region9: #{tpu_custom_call.1} parent=1 // pred_fallthru
      _
    %v21 = vld [vmem:[#allocation2] sm:$0xf]
    %v22 = vmul.f32 %v21, 2.0
    %v23 = vsub.f32 %v22, 17.0
    %v24 = vmul.f32 %v23, 0.06666667
    %v25 = vmul.f32 %v21, 0.0625
    %26 = vst [vmem:[#allocation5 - $0x2] sm:$0x4] %v25
    %27 = vst [vmem:[#allocation5 + $0x1] sm:$0x1] 0.0
    %28 = vst [vmem:[#allocation5 + $0x2] sm:$0x1] %v24
    %29 = vst [vmem:[#allocation5 + $0x3] sm:$0x1] 0.0
    %30 = vst [vmem:[#allocation5 + $0x1] sm:$0x8] %v25
    %31 = vst [vmem:[#allocation5 + $0x4] sm:$0x2] %v24
    // Predicated region
    $region10: #{tpu_custom_call.1} parent=1 // pred_check
      _
    $region11: #{tpu_custom_call.1} parent=1 // pred_check_branch
      %33 = sbr.rel (0) target = $region13
    $region12: #{tpu_custom_call.1} parent=1 // pred_region
      %s35 = ssub.s32 128, 128
      %36 = vsyncadd [#allocation4], %s35
      %s38 = sshll.u32 [#allocation5], 4
      %s39 = int_to_ptr.vmem [resolvable:$true] %s38
      %41 = dma.vmem_to_hbm [thread:$0]  %s39, 128, %s1, [#allocation4]
    $region13: #{tpu_custom_call.1} parent=1 // pred_fallthru
      _
    // Predicated region
    $region14: #{tpu_custom_call.1} parent=1 // pred_check
      _
    $region15: #{tpu_custom_call.1} parent=1 // pred_check_branch
      %43 = sbr.rel (0) target = $region17
    $region16: #{tpu_custom_call.1} parent=1 // pred_region
      %44 = dma.done [#allocation4], 128
    $region17: #{tpu_custom_call.1} parent=1 // pred_fallthru
      _
    %45 = vsyncpa [#allocation3], 1
    %46 = vsyncpa [#allocation4], 1

</llo_original>
